<compile_context>
chip_gen: v6e
topology: v6e:2x2x1
jax: 0.10.0
libtpu: 0.0.40
codegen_flags: <defaults>
</compile_context>

<pallas_src>
import jax
import jax.numpy as jnp
from jax.experimental import pallas as pl
from jax.experimental.pallas import tpu as pltpu

STATE_DIM = 32
ACTION_DIM = 8
H1, H2, H3 = 512, 256, 256

# Action scaling constants (from the PyTorch module)
SH_MIN, SH_MAX = -1.65, 1.65
EL_MIN, EL_MAX = -0.44, 1.55
SH_RANGE = (SH_MAX - SH_MIN) / 2.0
SH_MID = (SH_MAX + SH_MIN) / 2.0
EL_RANGE = (EL_MAX - EL_MIN) / 2.0
EL_MID = (EL_MAX + EL_MIN) / 2.0


def _round_up(n, m):
    return ((n + m - 1) // m) * m


def actor_kernel(x_ref, w1_ref, b1_ref, w2_ref, b2_ref, w3_ref, b3_ref,
                 w4_ref, b4_ref, scale_ref, mid_ref, out_ref):
    # bf16 matmul inputs, f32 accumulation; elementwise kept in f32.
    x = x_ref[...].astype(jnp.bfloat16)

    h = jnp.dot(x, w1_ref[...], preferred_element_type=jnp.float32) + b1_ref[...]
    h = jnp.maximum(h, 0.0).astype(jnp.bfloat16)

    h = jnp.dot(h, w2_ref[...], preferred_element_type=jnp.float32) + b2_ref[...]
    h = jnp.maximum(h, 0.0).astype(jnp.bfloat16)

    h = jnp.dot(h, w3_ref[...], preferred_element_type=jnp.float32) + b3_ref[...]
    h = jnp.maximum(h, 0.0).astype(jnp.bfloat16)

    a = jnp.dot(h, w4_ref[...], preferred_element_type=jnp.float32) + b4_ref[...]
    a = jnp.tanh(a)

    # Per-column fused multiply-add action scaling (even cols: shoulder,
    # odd cols: elbow), precomputed in the wrapper.
    out_ref[...] = a * scale_ref[...] + mid_ref[...]


def actor_forward(x, params, tb=256):
    (w1, b1, w2, b2, w3, b3, w4, b4) = params
    B = x.shape[0]

    # Batch tile: multiple of 8 sublanes; pad B so the grid divides evenly.
    TB = min(tb, _round_up(max(B, 1), 8))
    TB = _round_up(TB, 8)
    Bp = _round_up(B, TB)
    if Bp != B:
        x = jnp.pad(x, ((0, Bp - B), (0, 0)))
    grid = (Bp // TB,)

    # Precomputed per-column scale/offset, shape (1, ACTION_DIM).
    col = jnp.arange(ACTION_DIM)
    scale = jnp.where(col % 2 == 0, SH_RANGE, EL_RANGE).astype(jnp.float32)[None, :]
    mid = jnp.where(col % 2 == 0, SH_MID, EL_MID).astype(jnp.float32)[None, :]

    const = lambda i: (0, 0)  # resident (never re-DMA'd) operands
    weight_bytes = sum(int(w.size) * w.dtype.itemsize
                       for w in (w1, w2, w3, w4, b1, b2, b3, b4))
    flops = 2 * Bp * (STATE_DIM * H1 + H1 * H2 + H2 * H3 + H3 * ACTION_DIM)
    bytes_accessed = weight_bytes + Bp * STATE_DIM * 4 + Bp * ACTION_DIM * 4

    out = pl.pallas_call(
        actor_kernel,
        out_shape=jax.ShapeDtypeStruct((Bp, ACTION_DIM), jnp.float32),
        grid=grid,
        in_specs=[
            pl.BlockSpec((TB, STATE_DIM), lambda i: (i, 0)),   # x (tiled)
            pl.BlockSpec((STATE_DIM, H1), const),              # w1
            pl.BlockSpec((1, H1), const),                      # b1
            pl.BlockSpec((H1, H2), const),                     # w2
            pl.BlockSpec((1, H2), const),                      # b2
            pl.BlockSpec((H2, H3), const),                     # w3
            pl.BlockSpec((1, H3), const),                      # b3
            pl.BlockSpec((H3, ACTION_DIM), const),             # w4
            pl.BlockSpec((1, ACTION_DIM), const),              # b4
            pl.BlockSpec((1, ACTION_DIM), const),              # scale
            pl.BlockSpec((1, ACTION_DIM), const),              # mid
        ],
        out_specs=pl.BlockSpec((TB, ACTION_DIM), lambda i: (i, 0)),
        compiler_params=pltpu.CompilerParams(
            dimension_semantics=("parallel",)),
        cost_estimate=pl.CostEstimate(
            flops=int(flops),
            transcendentals=int(Bp * ACTION_DIM),
            bytes_accessed=int(bytes_accessed)),
    )(x, w1, b1, w2, b2, w3, b3, w4, b4, scale, mid)

    return out[:B]


def init_params(key):
    ks = jax.random.split(key, 8)

    def linear(kw, kb, fan_in, fan_out):
        # deterministic uniform init similar to PyTorch's default (+-1/sqrt(fan_in))
        bound = 1.0 / jnp.sqrt(float(fan_in))
        w = jax.random.uniform(kw, (fan_in, fan_out), jnp.float32, -bound, bound)
        b = jax.random.uniform(kb, (1, fan_out), jnp.float32, -bound, bound)
        # Weights stored bf16 (halves DMA, bf16-native MXU); biases stay f32.
        return w.astype(jnp.bfloat16), b

    w1, b1 = linear(ks[0], ks[1], STATE_DIM, H1)
    w2, b2 = linear(ks[2], ks[3], H1, H2)
    w3, b3 = linear(ks[4], ks[5], H2, H3)
    w4, b4 = linear(ks[6], ks[7], H3, ACTION_DIM)
    return (w1, b1, w2, b2, w3, b3, w4, b4)


def reference_forward(x, params):
    # Pure-JAX reference mirroring the kernel's mixed precision (bf16 matmul
    # inputs, f32 accumulation / elementwise).
    (w1, b1, w2, b2, w3, b3, w4, b4) = params

    def layer(h, w, b):
        y = jnp.dot(h.astype(jnp.bfloat16), w,
                    preferred_element_type=jnp.float32) + b
        return y

    h = jnp.maximum(layer(x, w1, b1), 0.0)
    h = jnp.maximum(layer(h, w2, b2), 0.0)
    h = jnp.maximum(layer(h, w3, b3), 0.0)
    a = jnp.tanh(layer(h, w4, b4))
    out = a
    out = out.at[:, 0::2].set(a[:, 0::2] * SH_RANGE + SH_MID)
    out = out.at[:, 1::2].set(a[:, 1::2] * EL_RANGE + EL_MID)
    return out


if __name__ == "__main__":
    key = jax.random.PRNGKey(0)
    kx, kp, kx2 = jax.random.split(key, 3)
    params = init_params(kp)

    # Small demo batch (as in the spec's usage).
    batch = 2
    x = jax.random.normal(kx, (batch, STATE_DIM), jnp.float32)
    out = jax.block_until_ready(actor_forward(x, params))
    ref = reference_forward(x, params)
    assert out.shape == (batch, ACTION_DIM)
    assert jnp.allclose(out, ref, atol=2e-2, rtol=2e-2)

    # Exercise the batch-tiled grid + padding path (grid of 3 steps).
    batch2 = 40
    x2 = jax.random.normal(kx2, (batch2, STATE_DIM), jnp.float32)
    out2 = jax.block_until_ready(actor_forward(x2, params, tb=16))
    ref2 = reference_forward(x2, params)
    assert out2.shape == (batch2, ACTION_DIM)
    assert jnp.allclose(out2, ref2, atol=2e-2, rtol=2e-2)

    print("KERNEL_OK")
</pallas_src>

<mosaic_0001>
module attributes {stable_mosaic.version = 11 : i64} {
  func.func @actor_kernel(%arg0: i32, %arg1: memref<8x32xf32, #tpu.memory_space<vmem>>, %arg2: memref<32x512xbf16, #tpu.memory_space<vmem>>, %arg3: memref<1x512xf32, #tpu.memory_space<vmem>>, %arg4: memref<512x256xbf16, #tpu.memory_space<vmem>>, %arg5: memref<1x256xf32, #tpu.memory_space<vmem>>, %arg6: memref<256x256xbf16, #tpu.memory_space<vmem>>, %arg7: memref<1x256xf32, #tpu.memory_space<vmem>>, %arg8: memref<256x8xbf16, #tpu.memory_space<vmem>>, %arg9: memref<1x8xf32, #tpu.memory_space<vmem>>, %arg10: memref<1x8xf32, #tpu.memory_space<vmem>>, %arg11: memref<1x8xf32, #tpu.memory_space<vmem>>, %arg12: memref<8x8xf32, #tpu.memory_space<vmem>>) attributes {dimension_semantics = [#tpu.dimension_semantics<parallel>], iteration_bounds = array<i64: 1>, scalar_prefetch = 0 : i64, scratch_operands = 0 : i64, tpu.core_type = #tpu.core_type<tc>, window_params = [{transform_indices = @transform_0, window_bounds = array<i64: 8, 32>}, {pipeline_mode = #tpu.pipeline_mode<synchronous>, transform_indices = @transform_1, window_bounds = array<i64: 32, 512>}, {pipeline_mode = #tpu.pipeline_mode<synchronous>, transform_indices = @transform_2, window_bounds = array<i64: 1, 512>}, {pipeline_mode = #tpu.pipeline_mode<synchronous>, transform_indices = @transform_3, window_bounds = array<i64: 512, 256>}, {pipeline_mode = #tpu.pipeline_mode<synchronous>, transform_indices = @transform_4, window_bounds = array<i64: 1, 256>}, {pipeline_mode = #tpu.pipeline_mode<synchronous>, transform_indices = @transform_5, window_bounds = array<i64: 256, 256>}, {pipeline_mode = #tpu.pipeline_mode<synchronous>, transform_indices = @transform_6, window_bounds = array<i64: 1, 256>}, {pipeline_mode = #tpu.pipeline_mode<synchronous>, transform_indices = @transform_7, window_bounds = array<i64: 256, 8>}, {pipeline_mode = #tpu.pipeline_mode<synchronous>, transform_indices = @transform_8, window_bounds = array<i64: 1, 8>}, {pipeline_mode = #tpu.pipeline_mode<synchronous>, transform_indices = @transform_9, window_bounds = array<i64: 1, 8>}, {pipeline_mode = #tpu.pipeline_mode<synchronous>, transform_indices = @transform_10, window_bounds = array<i64: 1, 8>}, {transform_indices = @transform_11, window_bounds = array<i64: 8, 8>}]} {
    %c0 = arith.constant 0 : index
    %c0_0 = arith.constant 0 : index
    %0 = vector.load %arg1[%c0, %c0_0] : memref<8x32xf32, #tpu.memory_space<vmem>>, vector<8x32xf32>
    %1 = arith.truncf %0 : vector<8x32xf32> to vector<8x32xbf16>
    %c0_1 = arith.constant 0 : index
    %c0_2 = arith.constant 0 : index
    %2 = vector.load %arg2[%c0_1, %c0_2] : memref<32x512xbf16, #tpu.memory_space<vmem>>, vector<32x512xbf16>
    %cst = arith.constant dense<0.000000e+00> : vector<8x512xf32>
    %3 = tpu.matmul %1, %2, %cst {dimension_numbers = #tpu.dot_dimension_numbers<[1], [0], [0], [1], [0, 0, 1, 1], [], []>} : vector<8x32xbf16>, vector<32x512xbf16>, vector<8x512xf32> -> vector<8x512xf32>
    %c0_3 = arith.constant 0 : index
    %c0_4 = arith.constant 0 : index
    %4 = vector.load %arg3[%c0_3, %c0_4] : memref<1x512xf32, #tpu.memory_space<vmem>>, vector<1x512xf32>
    %5 = vector.broadcast %4 : vector<1x512xf32> to vector<8x512xf32>
    %6 = arith.addf %3, %5 : vector<8x512xf32>
    %cst_5 = arith.constant 0.000000e+00 : f32
    %7 = vector.broadcast %cst_5 : f32 to vector<8x512xf32>
    %8 = arith.maximumf %6, %7 : vector<8x512xf32>
    %9 = arith.truncf %8 : vector<8x512xf32> to vector<8x512xbf16>
    %c0_6 = arith.constant 0 : index
    %c0_7 = arith.constant 0 : index
    %10 = vector.load %arg4[%c0_6, %c0_7] : memref<512x256xbf16, #tpu.memory_space<vmem>>, vector<512x256xbf16>
    %cst_8 = arith.constant dense<0.000000e+00> : vector<8x256xf32>
    %11 = tpu.matmul %9, %10, %cst_8 {dimension_numbers = #tpu.dot_dimension_numbers<[1], [0], [0], [1], [0, 0, 1, 1], [], []>} : vector<8x512xbf16>, vector<512x256xbf16>, vector<8x256xf32> -> vector<8x256xf32>
    %c0_9 = arith.constant 0 : index
    %c0_10 = arith.constant 0 : index
    %12 = vector.load %arg5[%c0_9, %c0_10] : memref<1x256xf32, #tpu.memory_space<vmem>>, vector<1x256xf32>
    %13 = vector.broadcast %12 : vector<1x256xf32> to vector<8x256xf32>
    %14 = arith.addf %11, %13 : vector<8x256xf32>
    %cst_11 = arith.constant 0.000000e+00 : f32
    %15 = vector.broadcast %cst_11 : f32 to vector<8x256xf32>
    %16 = arith.maximumf %14, %15 : vector<8x256xf32>
    %17 = arith.truncf %16 : vector<8x256xf32> to vector<8x256xbf16>
    %c0_12 = arith.constant 0 : index
    %c0_13 = arith.constant 0 : index
    %18 = vector.load %arg6[%c0_12, %c0_13] : memref<256x256xbf16, #tpu.memory_space<vmem>>, vector<256x256xbf16>
    %cst_14 = arith.constant dense<0.000000e+00> : vector<8x256xf32>
    %19 = tpu.matmul %17, %18, %cst_14 {dimension_numbers = #tpu.dot_dimension_numbers<[1], [0], [0], [1], [0, 0, 1, 1], [], []>} : vector<8x256xbf16>, vector<256x256xbf16>, vector<8x256xf32> -> vector<8x256xf32>
    %c0_15 = arith.constant 0 : index
    %c0_16 = arith.constant 0 : index
    %20 = vector.load %arg7[%c0_15, %c0_16] : memref<1x256xf32, #tpu.memory_space<vmem>>, vector<1x256xf32>
    %21 = vector.broadcast %20 : vector<1x256xf32> to vector<8x256xf32>
    %22 = arith.addf %19, %21 : vector<8x256xf32>
    %cst_17 = arith.constant 0.000000e+00 : f32
    %23 = vector.broadcast %cst_17 : f32 to vector<8x256xf32>
    %24 = arith.maximumf %22, %23 : vector<8x256xf32>
    %25 = arith.truncf %24 : vector<8x256xf32> to vector<8x256xbf16>
    %c0_18 = arith.constant 0 : index
    %c0_19 = arith.constant 0 : index
    %26 = vector.load %arg8[%c0_18, %c0_19] : memref<256x8xbf16, #tpu.memory_space<vmem>>, vector<256x8xbf16>
    %cst_20 = arith.constant dense<0.000000e+00> : vector<8x8xf32>
    %27 = tpu.matmul %25, %26, %cst_20 {dimension_numbers = #tpu.dot_dimension_numbers<[1], [0], [0], [1], [0, 0, 1, 1], [], []>} : vector<8x256xbf16>, vector<256x8xbf16>, vector<8x8xf32> -> vector<8x8xf32>
    %c0_21 = arith.constant 0 : index
    %c0_22 = arith.constant 0 : index
    %28 = vector.load %arg9[%c0_21, %c0_22] : memref<1x8xf32, #tpu.memory_space<vmem>>, vector<1x8xf32>
    %29 = vector.broadcast %28 : vector<1x8xf32> to vector<8x8xf32>
    %30 = arith.addf %27, %29 : vector<8x8xf32>
    %31 = math.tanh %30 : vector<8x8xf32>
    %c0_23 = arith.constant 0 : index
    %c0_24 = arith.constant 0 : index
    %32 = vector.load %arg10[%c0_23, %c0_24] : memref<1x8xf32, #tpu.memory_space<vmem>>, vector<1x8xf32>
    %33 = vector.broadcast %32 : vector<1x8xf32> to vector<8x8xf32>
    %34 = arith.mulf %31, %33 : vector<8x8xf32>
    %c0_25 = arith.constant 0 : index
    %c0_26 = arith.constant 0 : index
    %35 = vector.load %arg11[%c0_25, %c0_26] : memref<1x8xf32, #tpu.memory_space<vmem>>, vector<1x8xf32>
    %36 = vector.broadcast %35 : vector<1x8xf32> to vector<8x8xf32>
    %37 = arith.addf %34, %36 : vector<8x8xf32>
    %c0_27 = arith.constant 0 : index
    %c0_28 = arith.constant 0 : index
    %38 = vector.load %arg12[%c0_27, %c0_28] : memref<8x8xf32, #tpu.memory_space<vmem>>, vector<8x8xf32>
    tpu.vector_store %arg12[%c0_27, %c0_28], %37 {strides = array<i32>} : memref<8x8xf32, #tpu.memory_space<vmem>>, vector<8x8xf32>,
    return
  }
  func.func @transform_0(%arg0: i32) -> (i32, i32) {
    %c0_i32 = arith.constant 0 : i32
    %c0_i32_0 = arith.constant 0 : i32
    return %arg0, %c0_i32 : i32, i32
  }
  func.func @transform_1(%arg0: i32) -> (i32, i32) {
    %c0_i32 = arith.constant 0 : i32
    %c0_i32_0 = arith.constant 0 : i32
    %c0_i32_1 = arith.constant 0 : i32
    return %c0_i32, %c0_i32_0 : i32, i32
  }
  func.func @transform_2(%arg0: i32) -> (i32, i32) {
    %c0_i32 = arith.constant 0 : i32
    %c0_i32_0 = arith.constant 0 : i32
    %c0_i32_1 = arith.constant 0 : i32
    return %c0_i32, %c0_i32_0 : i32, i32
  }
  func.func @transform_3(%arg0: i32) -> (i32, i32) {
    %c0_i32 = arith.constant 0 : i32
    %c0_i32_0 = arith.constant 0 : i32
    %c0_i32_1 = arith.constant 0 : i32
    return %c0_i32, %c0_i32_0 : i32, i32
  }
  func.func @transform_4(%arg0: i32) -> (i32, i32) {
    %c0_i32 = arith.constant 0 : i32
    %c0_i32_0 = arith.constant 0 : i32
    %c0_i32_1 = arith.constant 0 : i32
    return %c0_i32, %c0_i32_0 : i32, i32
  }
  func.func @transform_5(%arg0: i32) -> (i32, i32) {
    %c0_i32 = arith.constant 0 : i32
    %c0_i32_0 = arith.constant 0 : i32
    %c0_i32_1 = arith.constant 0 : i32
    return %c0_i32, %c0_i32_0 : i32, i32
  }
  func.func @transform_6(%arg0: i32) -> (i32, i32) {
    %c0_i32 = arith.constant 0 : i32
    %c0_i32_0 = arith.constant 0 : i32
    %c0_i32_1 = arith.constant 0 : i32
    return %c0_i32, %c0_i32_0 : i32, i32
  }
  func.func @transform_7(%arg0: i32) -> (i32, i32) {
    %c0_i32 = arith.constant 0 : i32
    %c0_i32_0 = arith.constant 0 : i32
    %c0_i32_1 = arith.constant 0 : i32
    return %c0_i32, %c0_i32_0 : i32, i32
  }
  func.func @transform_8(%arg0: i32) -> (i32, i32) {
    %c0_i32 = arith.constant 0 : i32
    %c0_i32_0 = arith.constant 0 : i32
    %c0_i32_1 = arith.constant 0 : i32
    return %c0_i32, %c0_i32_0 : i32, i32
  }
  func.func @transform_9(%arg0: i32) -> (i32, i32) {
    %c0_i32 = arith.constant 0 : i32
    %c0_i32_0 = arith.constant 0 : i32
    %c0_i32_1 = arith.constant 0 : i32
    return %c0_i32, %c0_i32_0 : i32, i32
  }
  func.func @transform_10(%arg0: i32) -> (i32, i32) {
    %c0_i32 = arith.constant 0 : i32
    %c0_i32_0 = arith.constant 0 : i32
    %c0_i32_1 = arith.constant 0 : i32
    return %c0_i32, %c0_i32_0 : i32, i32
  }
  func.func @transform_11(%arg0: i32) -> (i32, i32) {
    %c0_i32 = arith.constant 0 : i32
    %c0_i32_0 = arith.constant 0 : i32
    return %arg0, %c0_i32 : i32, i32
  }
}

</mosaic_0001>

<llo_original>
// kernel: tpu_custom_call.1
$region0: #{tpu_custom_call.1}
  #allocation0 [shape = 'u32[]', space=smem, size = 0x4, offset = 0x4, fixed_abs, tag = 'smem constant byte address 0x4 - core index']
  #allocation1 [shape = 'u32[144,128]{1,0:T(1,128)}', space=vmem, size = 0x12000, scoped, tag = 'internal scratch']
  %s0 = inlined_call_operand.vmem [shape: f32[8,32], index: 0, kind: input, shape index: {}]
  %s1 = inlined_call_operand.vmem [shape: bf16[32,512], index: 1, kind: input, shape index: {}]
  %s2 = inlined_call_operand.vmem [shape: f32[1,512], index: 2, kind: input, shape index: {}]
  %s3 = inlined_call_operand.hbm [shape: bf16[512,256], index: 3, kind: input, shape index: {}]
  %s4 = inlined_call_operand.vmem [shape: f32[1,256], index: 4, kind: input, shape index: {}]
  %s5 = inlined_call_operand.hbm [shape: bf16[256,256], index: 5, kind: input, shape index: {}]
  %s6 = inlined_call_operand.vmem [shape: f32[1,256], index: 6, kind: input, shape index: {}]
  %s7 = inlined_call_operand.vmem [shape: bf16[256,8], index: 7, kind: input, shape index: {}]
  %s8 = inlined_call_operand.vmem [shape: f32[1,8], index: 8, kind: input, shape index: {}]
  %s9 = inlined_call_operand.vmem [shape: f32[1,8], index: 9, kind: input, shape index: {}]
  %s10 = inlined_call_operand.vmem [shape: f32[1,8], index: 10, kind: input, shape index: {}]
  %s11 = inlined_call_operand.hbm [shape: f32[8,8], index: 11, kind: output, shape index: {}]
  %s12 = sld [smem:[#allocation0]]
  $region62: #{tpu_custom_call.1} parent=0
    _
  %s14 = ssub.s32 1, %s12
  %s15 = scalar_select 0, %s14, %s12
  $region1: #{tpu_custom_call.1} parent=0
    #allocation2 [shape = 'u8[262144]{0}', space=vmem, size = 0x40000, scoped, tag = 'input window, operand 3, single buffered']
    #allocation3 [shape = 's32[1]{0}', space=sflag, size = 0x4, scoped, tag = 'scoped memory for tpu_custom_call.1']
    #allocation4 [shape = 's32[1]{0}', space=sflag, size = 0x4, scoped, tag = 'scoped memory for tpu_custom_call.1']
    #allocation5 [shape = 'u8[131072]{0}', space=vmem, size = 0x20000, scoped, tag = 'input window, operand 5, single buffered']
    #allocation6 [shape = 's32[1]{0}', space=sflag, size = 0x4, scoped, tag = 'scoped memory for tpu_custom_call.1']
    #allocation7 [shape = 'u8[4096]{0}', space=vmem, size = 0x1000, scoped, tag = 'output window, operand 0, single buffered']
    %16 = vsyncpa [#allocation3], 0
    %17 = vsyncpa [#allocation6], 0
    %18 = vsyncpa [#allocation4], 0
    // Predicated region
    $region2: #{tpu_custom_call.1} parent=1 // pred_check
      _
    $region3: #{tpu_custom_call.1} parent=1 // pred_check_branch
      %20 = sbr.rel (0) target = $region5
    $region4: #{tpu_custom_call.1} parent=1 // pred_region
      _
    $region5: #{tpu_custom_call.1} parent=1 // pred_fallthru
      _
    // Predicated region
    $region6: #{tpu_custom_call.1} parent=1 // pred_check
      _
    $region7: #{tpu_custom_call.1} parent=1 // pred_check_branch
      %22 = sbr.rel (0) target = $region9
    $region8: #{tpu_custom_call.1} parent=1 // pred_region
      _
    $region9: #{tpu_custom_call.1} parent=1 // pred_fallthru
      _
    // Predicated region
    $region10: #{tpu_custom_call.1} parent=1 // pred_check
      _
    $region11: #{tpu_custom_call.1} parent=1 // pred_check_branch
      %24 = sbr.rel (0) target = $region13
    $region12: #{tpu_custom_call.1} parent=1 // pred_region
      _
    $region13: #{tpu_custom_call.1} parent=1 // pred_fallthru
      _
    // Predicated region
    $region14: #{tpu_custom_call.1} parent=1 // pred_check
      _
    $region15: #{tpu_custom_call.1} parent=1 // pred_check_branch
      %26 = sbr.rel (0) target = $region17
    $region16: #{tpu_custom_call.1} parent=1 // pred_region
      %s28 = ssub.s32 8192, 8192
      %29 = vsyncadd [#allocation3], %s28
      %s30 = sshll.u32 [#allocation2], 4
      %s31 = int_to_ptr.vmem [resolvable:$true] %s30
      %36 = dma.hbm_to_vmem [thread:$0]  %s3, 8192, %s31, [#allocation3], 128, 128, 8
    $region17: #{tpu_custom_call.1} parent=1 // pred_fallthru
      _
    // Predicated region
    $region18: #{tpu_custom_call.1} parent=1 // pred_check
      _
    $region19: #{tpu_custom_call.1} parent=1 // pred_check_branch
      %38 = sbr.rel (0) target = $region21
    $region20: #{tpu_custom_call.1} parent=1 // pred_region
      _
    $region21: #{tpu_custom_call.1} parent=1 // pred_fallthru
      _
    // Predicated region
    $region22: #{tpu_custom_call.1} parent=1 // pred_check
      _
    $region23: #{tpu_custom_call.1} parent=1 // pred_check_branch
      %40 = sbr.rel (0) target = $region25
    $region24: #{tpu_custom_call.1} parent=1 // pred_region
      %s42 = ssub.s32 4096, 4096
      %43 = vsyncadd [#allocation6], %s42
      %s44 = sshll.u32 [#allocation5], 4
      %s45 = int_to_ptr.vmem [resolvable:$true] %s44
      %50 = dma.hbm_to_vmem [thread:$0]  %s5, 4096, %s45, [#allocation6], 128, 128, 8
    $region25: #{tpu_custom_call.1} parent=1 // pred_fallthru
      _
    // Predicated region
    $region26: #{tpu_custom_call.1} parent=1 // pred_check
      _
    $region27: #{tpu_custom_call.1} parent=1 // pred_check_branch
      %52 = sbr.rel (0) target = $region29
    $region28: #{tpu_custom_call.1} parent=1 // pred_region
      _
    $region29: #{tpu_custom_call.1} parent=1 // pred_fallthru
      _
    // Predicated region
    $region30: #{tpu_custom_call.1} parent=1 // pred_check
      _
    $region31: #{tpu_custom_call.1} parent=1 // pred_check_branch
      %54 = sbr.rel (0) target = $region33
    $region32: #{tpu_custom_call.1} parent=1 // pred_region
      _
    $region33: #{tpu_custom_call.1} parent=1 // pred_fallthru
      _
    // Predicated region
    $region34: #{tpu_custom_call.1} parent=1 // pred_check
      _
    $region35: #{tpu_custom_call.1} parent=1 // pred_check_branch
      %56 = sbr.rel (0) target = $region37
    $region36: #{tpu_custom_call.1} parent=1 // pred_region
      _
    $region37: #{tpu_custom_call.1} parent=1 // pred_fallthru
      _
    // Predicated region
    $region38: #{tpu_custom_call.1} parent=1 // pred_check
      _
    $region39: #{tpu_custom_call.1} parent=1 // pred_check_branch
      %58 = sbr.rel (0) target = $region41
    $region40: #{tpu_custom_call.1} parent=1 // pred_region
      _
    $region41: #{tpu_custom_call.1} parent=1 // pred_fallthru
      _
    // Predicated region
    $region42: #{tpu_custom_call.1} parent=1 // pred_check
      _
    $region43: #{tpu_custom_call.1} parent=1 // pred_check_branch
      %60 = sbr.rel (0) target = $region45
    $region44: #{tpu_custom_call.1} parent=1 // pred_region
      _
    $region45: #{tpu_custom_call.1} parent=1 // pred_fallthru
      _
    // Predicated region
    $region46: #{tpu_custom_call.1} parent=1 // pred_check
      _
    $region47: #{tpu_custom_call.1} parent=1 // pred_check_branch
      %62 = sbr.rel (0) target = $region49
    $region48: #{tpu_custom_call.1} parent=1 // pred_region
      %63 = dma.done [#allocation3], 8192
    $region49: #{tpu_custom_call.1} parent=1 // pred_fallthru
      _
    // Predicated region
    $region50: #{tpu_custom_call.1} parent=1 // pred_check
      _
    $region51: #{tpu_custom_call.1} parent=1 // pred_check_branch
      %65 = sbr.rel (0) target = $region53
    $region52: #{tpu_custom_call.1} parent=1 // pred_region
      %66 = dma.done [#allocation6], 4096
    $region53: #{tpu_custom_call.1} parent=1 // pred_fallthru
      _
    %v68 = vld [vmem:[%s0] sm:$0xff]
    %v69 = vpack.c.bf16 %v68, %v68
    %v70 = vld [vmem:[%s1] sm:$0xff]
    %v71 = vld [vmem:[%s1 + $0x8] sm:$0xff]
    %v72 = vld [vmem:[%s1 + $0x10] sm:$0xff]
    %v73 = vld [vmem:[%s1 + $0x18] sm:$0xff]
    %v74 = vld [vmem:[%s1 + $0x20] sm:$0xff]
    %v75 = vld [vmem:[%s1 + $0x28] sm:$0xff]
    %v76 = vld [vmem:[%s1 + $0x30] sm:$0xff]
    %v77 = vld [vmem:[%s1 + $0x38] sm:$0xff]
    %v78 = vld [vmem:[%s2] sm:$0xf]
    %v80 = vlaneseq
    %v81 = vshrl.u32 %v80, 7
    %v82 = vsub.s32 0, %v81
    %v83 = vrot.slane %v78, %v82
    %v84 = vlaneseq
    %v85 = vshrl.u32 %v84, 7
    %v86 = vsub.s32 1, %v85
    %v87 = vrot.slane %v78, %v86
    %v88 = vlaneseq
    %v89 = vshrl.u32 %v88, 7
    %v90 = vsub.s32 2, %v89
    %v91 = vrot.slane %v78, %v90
    %v92 = vlaneseq
    %v93 = vshrl.u32 %v92, 7
    %v94 = vsub.s32 3, %v93
    %v95 = vrot.slane %v78, %v94
    %v108 = vunpack.c.l.b16 %v70
    %v109 = vunpack.c.h.b16 %v70
    %v110 = vunpack.c.l.b16 %v71
    %v111 = vunpack.c.h.b16 %v71
    %v112 = vunpack.c.l.b16 %v72
    %v113 = vunpack.c.h.b16 %v72
    %v114 = vunpack.c.l.b16 %v73
    %v115 = vunpack.c.h.b16 %v73
    %v116 = vunpack.c.l.b16 %v74
    %v117 = vunpack.c.h.b16 %v74
    %v118 = vunpack.c.l.b16 %v75
    %v119 = vunpack.c.h.b16 %v75
    %v120 = vunpack.c.l.b16 %v76
    %v121 = vunpack.c.h.b16 %v76
    %v122 = vunpack.c.l.b16 %v77
    %v123 = vunpack.c.h.b16 %v77
    %v124 = vpack.c.b16 %v112, %v108
    %v125 = vpack.c.b16 %v113, %v109
    %v126 = vpack.c.b16 %v114, %v110
    %v127 = vpack.c.b16 %v115, %v111
    %v128 = vpack.c.b16 %v120, %v116
    %v129 = vpack.c.b16 %v121, %v117
    %v130 = vpack.c.b16 %v122, %v118
    %v131 = vpack.c.b16 %v123, %v119
    %vm140 = vcmask 261120
    %v142 = vsel %vm140, %v69, 0
    %144 = vmatprep.subr.bf16.mxu0 0
    %145 = vmatpush1.bf16.msra.mxu0 0
    %146 = vmatprep.subr.bf16.mxu0 0
    %147 = vmatpush1.bf16.msra.mxu0 0
    %148 = vmatprep.subr.bf16.mxu0 0
    %149 = vmatpush1.bf16.msra.mxu0 0
    %150 = vmatprep.subr.bf16.mxu0 0
    %151 = vmatpush1.bf16.msra.mxu0 0
    %152 = vmatprep.subr.bf16.mxu0 0
    %153 = vmatpush1.bf16.msra.mxu0 0
    %154 = vmatprep.subr.bf16.mxu0 0
    %155 = vmatpush1.bf16.msra.mxu0 0
    %156 = vmatprep.subr.bf16.mxu0 %v129
    %157 = vmatpush1.bf16.msra.mxu0 %v128
    %158 = vmatprep.subr.bf16.mxu0 %v125
    %159 = vmatpush1.bf16.msra.mxu0 %v124
    %160 = vmatprep.subr.bf16.mxu0 0
    %161 = vmatpush2.bf16.msra.mxu0 0
    %162 = vmatprep.subr.bf16.mxu0 0
    %163 = vmatpush2.bf16.msra.mxu0 0
    %164 = vmatprep.subr.bf16.mxu0 0
    %165 = vmatpush2.bf16.msra.mxu0 0
    %166 = vmatprep.subr.bf16.mxu0 0
    %167 = vmatpush2.bf16.msra.mxu0 0
    %168 = vmatprep.subr.bf16.mxu0 0
    %169 = vmatpush2.bf16.msra.mxu0 0
    %170 = vmatprep.subr.bf16.mxu0 0
    %171 = vmatpush2.bf16.msra.mxu0 0
    %172 = vmatprep.subr.bf16.mxu0 0
    %173 = vmatpush2.bf16.msra.mxu0 0
    %174 = vmatprep.subr.bf16.mxu0 0
    %175 = vmatpush2.bf16.msra.mxu0 0
    %176 = vmatprep.mubr.bf16.mxu0 0
    %177 = vmatmul.mubr.bf16.gmra.mxu0 %v142
    %v178 = vpop.f32.mrf.mxu0
    %v179 = vadd.f32 %v83, %v178
    %v180 = vpop.f32.mrf.mxu0
    %v181 = vadd.f32 %v87, %v180
    %v182 = vpop.f32.mrf.mxu0
    %v183 = vpop.f32.mrf.mxu0
    %184 = vdwg.mxu0
    %185 = vmatprep.subr.bf16.mxu0 0
    %186 = vmatpush1.bf16.msra.mxu0 0
    %187 = vmatprep.subr.bf16.mxu0 0
    %188 = vmatpush1.bf16.msra.mxu0 0
    %189 = vmatprep.subr.bf16.mxu0 0
    %190 = vmatpush1.bf16.msra.mxu0 0
    %191 = vmatprep.subr.bf16.mxu0 0
    %192 = vmatpush1.bf16.msra.mxu0 0
    %193 = vmatprep.subr.bf16.mxu0 0
    %194 = vmatpush1.bf16.msra.mxu0 0
    %195 = vmatprep.subr.bf16.mxu0 0
    %196 = vmatpush1.bf16.msra.mxu0 0
    %197 = vmatprep.subr.bf16.mxu0 %v131
    %198 = vmatpush1.bf16.msra.mxu0 %v130
    %199 = vmatprep.subr.bf16.mxu0 %v127
    %200 = vmatpush1.bf16.msra.mxu0 %v126
    %201 = vmatprep.subr.bf16.mxu0 0
    %202 = vmatpush2.bf16.msra.mxu0 0
    %203 = vmatprep.subr.bf16.mxu0 0
    %204 = vmatpush2.bf16.msra.mxu0 0
    %205 = vmatprep.subr.bf16.mxu0 0
    %206 = vmatpush2.bf16.msra.mxu0 0
    %207 = vmatprep.subr.bf16.mxu0 0
    %208 = vmatpush2.bf16.msra.mxu0 0
    %209 = vmatprep.subr.bf16.mxu0 0
    %210 = vmatpush2.bf16.msra.mxu0 0
    %211 = vmatprep.subr.bf16.mxu0 0
    %212 = vmatpush2.bf16.msra.mxu0 0
    %213 = vmatprep.subr.bf16.mxu0 0
    %214 = vmatpush2.bf16.msra.mxu0 0
    %215 = vmatprep.subr.bf16.mxu0 0
    %216 = vmatpush2.bf16.msra.mxu0 0
    %217 = vmatprep.mubr.bf16.mxu0 0
    %218 = vmatmul.mubr.bf16.gmra.mxu0 %v142
    %v219 = vpop.f32.mrf.mxu0
    %v220 = vadd.f32 %v91, %v219
    %v221 = vpop.f32.mrf.mxu0
    %v222 = vadd.f32 %v95, %v221
    %v223 = vpop.f32.mrf.mxu0
    %v224 = vpop.f32.mrf.mxu0
    %225 = vdwg.mxu0
    %v226 = vmax.f32 %v179, 0.0
    %v227 = vmax.f32 %v181, 0.0
    %v228 = vmax.f32 %v220, 0.0
    %v229 = vmax.f32 %v222, 0.0
    %v230 = vpack.c.bf16 %v226, %v226
    %v231 = vpack.c.bf16 %v227, %v227
    %v232 = vpack.c.bf16 %v228, %v228
    %v233 = vpack.c.bf16 %v229, %v229
    %v234 = vld [vmem:[#allocation2] sm:$0xff]
    %v235 = vld [vmem:[#allocation2 + $0x8] sm:$0xff]
    %v236 = vld [vmem:[#allocation2 + $0x10] sm:$0xff]
    %v237 = vld [vmem:[#allocation2 + $0x18] sm:$0xff]
    %v238 = vld [vmem:[#allocation2 + $0x20] sm:$0xff]
    %v239 = vld [vmem:[#allocation2 + $0x28] sm:$0xff]
    %v240 = vld [vmem:[#allocation2 + $0x30] sm:$0xff]
    %v241 = vld [vmem:[#allocation2 + $0x38] sm:$0xff]
    %v242 = vld [vmem:[#allocation2 + $0x40] sm:$0xff]
    %v243 = vld [vmem:[#allocation2 + $0x48] sm:$0xff]
    %v244 = vld [vmem:[#allocation2 + $0x50] sm:$0xff]
    %v245 = vld [vmem:[#allocation2 + $0x58] sm:$0xff]
    %v246 = vld [vmem:[#allocation2 + $0x60] sm:$0xff]
    %v247 = vld [vmem:[#allocation2 + $0x68] sm:$0xff]
    %v248 = vld [vmem:[#allocation2 + $0x70] sm:$0xff]
    %v249 = vld [vmem:[#allocation2 + $0x78] sm:$0xff]
    %v250 = vld [vmem:[#allocation2 + $0x80] sm:$0xff]
    %v251 = vld [vmem:[#allocation2 + $0x88] sm:$0xff]
    %v252 = vld [vmem:[#allocation2 + $0x90] sm:$0xff]
    %v253 = vld [vmem:[#allocation2 + $0x98] sm:$0xff]
    %v254 = vld [vmem:[#allocation2 + $0xa0] sm:$0xff]
    %v255 = vld [vmem:[#allocation2 + $0xa8] sm:$0xff]
    %v256 = vld [vmem:[#allocation2 + $0xb0] sm:$0xff]
    %v257 = vld [vmem:[#allocation2 + $0xb8] sm:$0xff]
    %v258 = vld [vmem:[#allocation2 + $0xc0] sm:$0xff]
    %v259 = vld [vmem:[#allocation2 + $0xc8] sm:$0xff]
    %v260 = vld [vmem:[#allocation2 + $0xd0] sm:$0xff]
    %v261 = vld [vmem:[#allocation2 + $0xd8] sm:$0xff]
    %v262 = vld [vmem:[#allocation2 + $0xe0] sm:$0xff]
    %v263 = vld [vmem:[#allocation2 + $0xe8] sm:$0xff]
    %v264 = vld [vmem:[#allocation2 + $0xf0] sm:$0xff]
    %v265 = vld [vmem:[#allocation2 + $0xf8] sm:$0xff]
    %v266 = vld [vmem:[#allocation2 + $0x100] sm:$0xff]
    %v267 = vld [vmem:[#allocation2 + $0x108] sm:$0xff]
    %v268 = vld [vmem:[#allocation2 + $0x110] sm:$0xff]
    %v269 = vld [vmem:[#allocation2 + $0x118] sm:$0xff]
    %v270 = vld [vmem:[#allocation2 + $0x120] sm:$0xff]
    %v271 = vld [vmem:[#allocation2 + $0x128] sm:$0xff]
    %v272 = vld [vmem:[#allocation2 + $0x130] sm:$0xff]
    %v273 = vld [vmem:[#allocation2 + $0x138] sm:$0xff]
    %v274 = vld [vmem:[#allocation2 + $0x140] sm:$0xff]
    %v275 = vld [vmem:[#allocation2 + $0x148] sm:$0xff]
    %v276 = vld [vmem:[#allocation2 + $0x150] sm:$0xff]
    %v277 = vld [vmem:[#allocation2 + $0x158] sm:$0xff]
    %v278 = vld [vmem:[#allocation2 + $0x160] sm:$0xff]
    %v279 = vld [vmem:[#allocation2 + $0x168] sm:$0xff]
    %v280 = vld [vmem:[#allocation2 + $0x170] sm:$0xff]
    %v281 = vld [vmem:[#allocation2 + $0x178] sm:$0xff]
    %v282 = vld [vmem:[#allocation2 + $0x180] sm:$0xff]
    %v283 = vld [vmem:[#allocation2 + $0x188] sm:$0xff]
    %v284 = vld [vmem:[#allocation2 + $0x190] sm:$0xff]
    %v285 = vld [vmem:[#allocation2 + $0x198] sm:$0xff]
    %v286 = vld [vmem:[#allocation2 + $0x1a0] sm:$0xff]
    %v287 = vld [vmem:[#allocation2 + $0x1a8] sm:$0xff]
    %v288 = vld [vmem:[#allocation2 + $0x1b0] sm:$0xff]
    %v289 = vld [vmem:[#allocation2 + $0x1b8] sm:$0xff]
    %v290 = vld [vmem:[#allocation2 + $0x1c0] sm:$0xff]
    %v291 = vld [vmem:[#allocation2 + $0x1c8] sm:$0xff]
    %v292 = vld [vmem:[#allocation2 + $0x1d0] sm:$0xff]
    %v293 = vld [vmem:[#allocation2 + $0x1d8] sm:$0xff]
    %v294 = vld [vmem:[#allocation2 + $0x1e0] sm:$0xff]
    %v295 = vld [vmem:[#allocation2 + $0x1e8] sm:$0xff]
    %v296 = vld [vmem:[#allocation2 + $0x1f0] sm:$0xff]
    %v297 = vld [vmem:[#allocation2 + $0x1f8] sm:$0xff]
    %v298 = vld [vmem:[%s4] sm:$0x3]
    %v300 = vlaneseq
    %v301 = vshrl.u32 %v300, 7
    %v302 = vsub.s32 0, %v301
    %v303 = vrot.slane %v298, %v302
    %v304 = vlaneseq
    %v305 = vshrl.u32 %v304, 7
    %v306 = vsub.s32 1, %v305
    %v307 = vrot.slane %v298, %v306
    %v374 = vunpack.c.l.b16 %v234
    %v375 = vunpack.c.h.b16 %v234
    %v376 = vunpack.c.l.b16 %v235
    %v377 = vunpack.c.h.b16 %v235
    %v378 = vunpack.c.l.b16 %v236
    %v379 = vunpack.c.h.b16 %v236
    %v380 = vunpack.c.l.b16 %v237
    %v381 = vunpack.c.h.b16 %v237
    %v382 = vunpack.c.l.b16 %v238
    %v383 = vunpack.c.h.b16 %v238
    %v384 = vunpack.c.l.b16 %v239
    %v385 = vunpack.c.h.b16 %v239
    %v386 = vunpack.c.l.b16 %v240
    %v387 = vunpack.c.h.b16 %v240
    %v388 = vunpack.c.l.b16 %v241
    %v389 = vunpack.c.h.b16 %v241
    %v390 = vunpack.c.l.b16 %v242
    %v391 = vunpack.c.h.b16 %v242
    %v392 = vunpack.c.l.b16 %v243
    %v393 = vunpack.c.h.b16 %v243
    %v394 = vunpack.c.l.b16 %v244
    %v395 = vunpack.c.h.b16 %v244
    %v396 = vunpack.c.l.b16 %v245
    %v397 = vunpack.c.h.b16 %v245
    %v398 = vunpack.c.l.b16 %v246
    %v399 = vunpack.c.h.b16 %v246
    %v400 = vunpack.c.l.b16 %v247
    %v401 = vunpack.c.h.b16 %v247
    %v402 = vunpack.c.l.b16 %v248
    %v403 = vunpack.c.h.b16 %v248
    %v404 = vunpack.c.l.b16 %v249
    %v405 = vunpack.c.h.b16 %v249
    %v406 = vunpack.c.l.b16 %v250
    %v407 = vunpack.c.h.b16 %v250
    %v408 = vunpack.c.l.b16 %v251
    %v409 = vunpack.c.h.b16 %v251
    %v410 = vunpack.c.l.b16 %v252
    %v411 = vunpack.c.h.b16 %v252
    %v412 = vunpack.c.l.b16 %v253
    %v413 = vunpack.c.h.b16 %v253
    %v414 = vunpack.c.l.b16 %v254
    %v415 = vunpack.c.h.b16 %v254
    %v416 = vunpack.c.l.b16 %v255
    %v417 = vunpack.c.h.b16 %v255
    %v418 = vunpack.c.l.b16 %v256
    %v419 = vunpack.c.h.b16 %v256
    %v420 = vunpack.c.l.b16 %v257
    %v421 = vunpack.c.h.b16 %v257
    %v422 = vunpack.c.l.b16 %v258
    %v423 = vunpack.c.h.b16 %v258
    %v424 = vunpack.c.l.b16 %v259
    %v425 = vunpack.c.h.b16 %v259
    %v426 = vunpack.c.l.b16 %v260
    %v427 = vunpack.c.h.b16 %v260
    %v428 = vunpack.c.l.b16 %v261
    %v429 = vunpack.c.h.b16 %v261
    %v430 = vunpack.c.l.b16 %v262
    %v431 = vunpack.c.h.b16 %v262
    %v432 = vunpack.c.l.b16 %v263
    %v433 = vunpack.c.h.b16 %v263
    %v434 = vunpack.c.l.b16 %v264
    %v435 = vunpack.c.h.b16 %v264
    %v436 = vunpack.c.l.b16 %v265
    %v437 = vunpack.c.h.b16 %v265
    %v438 = vunpack.c.l.b16 %v266
    %v439 = vunpack.c.h.b16 %v266
    %v440 = vunpack.c.l.b16 %v267
    %v441 = vunpack.c.h.b16 %v267
    %v442 = vunpack.c.l.b16 %v268
    %v443 = vunpack.c.h.b16 %v268
    %v444 = vunpack.c.l.b16 %v269
    %v445 = vunpack.c.h.b16 %v269
    %v446 = vunpack.c.l.b16 %v270
    %v447 = vunpack.c.h.b16 %v270
    %v448 = vunpack.c.l.b16 %v271
    %v449 = vunpack.c.h.b16 %v271
    %v450 = vunpack.c.l.b16 %v272
    %v451 = vunpack.c.h.b16 %v272
    %v452 = vunpack.c.l.b16 %v273
    %v453 = vunpack.c.h.b16 %v273
    %v454 = vunpack.c.l.b16 %v274
    %v455 = vunpack.c.h.b16 %v274
    %v456 = vunpack.c.l.b16 %v275
    %v457 = vunpack.c.h.b16 %v275
    %v458 = vunpack.c.l.b16 %v276
    %v459 = vunpack.c.h.b16 %v276
    %v460 = vunpack.c.l.b16 %v277
    %v461 = vunpack.c.h.b16 %v277
    %v462 = vunpack.c.l.b16 %v278
    %v463 = vunpack.c.h.b16 %v278
    %v464 = vunpack.c.l.b16 %v279
    %v465 = vunpack.c.h.b16 %v279
    %v466 = vunpack.c.l.b16 %v280
    %v467 = vunpack.c.h.b16 %v280
    %v468 = vunpack.c.l.b16 %v281
    %v469 = vunpack.c.h.b16 %v281
    %v470 = vunpack.c.l.b16 %v282
    %v471 = vunpack.c.h.b16 %v282
    %v472 = vunpack.c.l.b16 %v283
    %v473 = vunpack.c.h.b16 %v283
    %v474 = vunpack.c.l.b16 %v284
    %v475 = vunpack.c.h.b16 %v284
    %v476 = vunpack.c.l.b16 %v285
    %v477 = vunpack.c.h.b16 %v285
    %v478 = vunpack.c.l.b16 %v286
    %v479 = vunpack.c.h.b16 %v286
    %v480 = vunpack.c.l.b16 %v287
    %v481 = vunpack.c.h.b16 %v287
    %v482 = vunpack.c.l.b16 %v288
    %v483 = vunpack.c.h.b16 %v288
    %v484 = vunpack.c.l.b16 %v289
    %v485 = vunpack.c.h.b16 %v289
    %v486 = vunpack.c.l.b16 %v290
    %v487 = vunpack.c.h.b16 %v290
    %v488 = vunpack.c.l.b16 %v291
    %v489 = vunpack.c.h.b16 %v291
    %v490 = vunpack.c.l.b16 %v292
    %v491 = vunpack.c.h.b16 %v292
    %v492 = vunpack.c.l.b16 %v293
    %v493 = vunpack.c.h.b16 %v293
    %v494 = vunpack.c.l.b16 %v294
    %v495 = vunpack.c.h.b16 %v294
    %v496 = vunpack.c.l.b16 %v295
    %v497 = vunpack.c.h.b16 %v295
    %v498 = vunpack.c.l.b16 %v296
    %v499 = vunpack.c.h.b16 %v296
    %v500 = vunpack.c.l.b16 %v297
    %v501 = vunpack.c.h.b16 %v297
    %v502 = vpack.c.b16 %v376, %v374
    %v503 = vpack.c.b16 %v377, %v375
    %v504 = vpack.c.b16 %v380, %v378
    %v505 = vpack.c.b16 %v381, %v379
    %v506 = vpack.c.b16 %v384, %v382
    %v507 = vpack.c.b16 %v385, %v383
    %v508 = vpack.c.b16 %v388, %v386
    %v509 = vpack.c.b16 %v389, %v387
    %v510 = vpack.c.b16 %v392, %v390
    %v511 = vpack.c.b16 %v393, %v391
    %v512 = vpack.c.b16 %v396, %v394
    %v513 = vpack.c.b16 %v397, %v395
    %v514 = vpack.c.b16 %v400, %v398
    %v515 = vpack.c.b16 %v401, %v399
    %v516 = vpack.c.b16 %v404, %v402
    %v517 = vpack.c.b16 %v405, %v403
    %v518 = vpack.c.b16 %v408, %v406
    %v519 = vpack.c.b16 %v409, %v407
    %v520 = vpack.c.b16 %v412, %v410
    %v521 = vpack.c.b16 %v413, %v411
    %v522 = vpack.c.b16 %v416, %v414
    %v523 = vpack.c.b16 %v417, %v415
    %v524 = vpack.c.b16 %v420, %v418
    %v525 = vpack.c.b16 %v421, %v419
    %v526 = vpack.c.b16 %v424, %v422
    %v527 = vpack.c.b16 %v425, %v423
    %v528 = vpack.c.b16 %v428, %v426
    %v529 = vpack.c.b16 %v429, %v427
    %v530 = vpack.c.b16 %v432, %v430
    %v531 = vpack.c.b16 %v433, %v431
    %v532 = vpack.c.b16 %v436, %v434
    %v533 = vpack.c.b16 %v437, %v435
    %v534 = vpack.c.b16 %v440, %v438
    %v535 = vpack.c.b16 %v441, %v439
    %v536 = vpack.c.b16 %v444, %v442
    %v537 = vpack.c.b16 %v445, %v443
    %v538 = vpack.c.b16 %v448, %v446
    %v539 = vpack.c.b16 %v449, %v447
    %v540 = vpack.c.b16 %v452, %v450
    %v541 = vpack.c.b16 %v453, %v451
    %v542 = vpack.c.b16 %v456, %v454
    %v543 = vpack.c.b16 %v457, %v455
    %v544 = vpack.c.b16 %v460, %v458
    %v545 = vpack.c.b16 %v461, %v459
    %v546 = vpack.c.b16 %v464, %v462
    %v547 = vpack.c.b16 %v465, %v463
    %v548 = vpack.c.b16 %v468, %v466
    %v549 = vpack.c.b16 %v469, %v467
    %v550 = vpack.c.b16 %v472, %v470
    %v551 = vpack.c.b16 %v473, %v471
    %v552 = vpack.c.b16 %v476, %v474
    %v553 = vpack.c.b16 %v477, %v475
    %v554 = vpack.c.b16 %v480, %v478
    %v555 = vpack.c.b16 %v481, %v479
    %v556 = vpack.c.b16 %v484, %v482
    %v557 = vpack.c.b16 %v485, %v483
    %v558 = vpack.c.b16 %v488, %v486
    %v559 = vpack.c.b16 %v489, %v487
    %v560 = vpack.c.b16 %v492, %v490
    %v561 = vpack.c.b16 %v493, %v491
    %v562 = vpack.c.b16 %v496, %v494
    %v563 = vpack.c.b16 %v497, %v495
    %v564 = vpack.c.b16 %v500, %v498
    %v565 = vpack.c.b16 %v501, %v499
    %630 = vmatprep.subr.bf16.mxu0 %v517
    %631 = vmatpush1.bf16.msra.mxu0 %v516
    %632 = vmatprep.subr.bf16.mxu0 %v515
    %633 = vmatpush1.bf16.msra.mxu0 %v514
    %634 = vmatprep.subr.bf16.mxu0 %v513
    %635 = vmatpush1.bf16.msra.mxu0 %v512
    %636 = vmatprep.subr.bf16.mxu0 %v511
    %637 = vmatpush1.bf16.msra.mxu0 %v510
    %638 = vmatprep.subr.bf16.mxu0 %v509
    %639 = vmatpush1.bf16.msra.mxu0 %v508
    %640 = vmatprep.subr.bf16.mxu0 %v507
    %641 = vmatpush1.bf16.msra.mxu0 %v506
    %642 = vmatprep.subr.bf16.mxu0 %v505
    %643 = vmatpush1.bf16.msra.mxu0 %v504
    %644 = vmatprep.subr.bf16.mxu0 %v503
    %645 = vmatpush1.bf16.msra.mxu0 %v502
    %646 = vmatprep.subr.bf16.mxu0 %v533
    %647 = vmatpush2.bf16.msra.mxu0 %v532
    %648 = vmatprep.subr.bf16.mxu0 %v531
    %649 = vmatpush2.bf16.msra.mxu0 %v530
    %650 = vmatprep.subr.bf16.mxu0 %v529
    %651 = vmatpush2.bf16.msra.mxu0 %v528
    %652 = vmatprep.subr.bf16.mxu0 %v527
    %653 = vmatpush2.bf16.msra.mxu0 %v526
    %654 = vmatprep.subr.bf16.mxu0 %v525
    %655 = vmatpush2.bf16.msra.mxu0 %v524
    %656 = vmatprep.subr.bf16.mxu0 %v523
    %657 = vmatpush2.bf16.msra.mxu0 %v522
    %658 = vmatprep.subr.bf16.mxu0 %v521
    %659 = vmatpush2.bf16.msra.mxu0 %v520
    %660 = vmatprep.subr.bf16.mxu0 %v519
    %661 = vmatpush2.bf16.msra.mxu0 %v518
    %662 = vmatprep.mubr.bf16.mxu0 %v231
    %663 = vmatmul.mubr.bf16.gmra.mxu0 %v230
    %v664 = vpop.f32.mrf.mxu0
    %v665 = vadd.f32 %v303, %v664
    %v666 = vpop.f32.mrf.mxu0
    %v667 = vadd.f32 %v307, %v666
    %v668 = vpop.f32.mrf.mxu0
    %v669 = vpop.f32.mrf.mxu0
    %670 = vdwg.mxu0
    %671 = vmatprep.subr.bf16.mxu0 %v549
    %672 = vmatpush1.bf16.msra.mxu0 %v548
    %673 = vmatprep.subr.bf16.mxu0 %v547
    %674 = vmatpush1.bf16.msra.mxu0 %v546
    %675 = vmatprep.subr.bf16.mxu0 %v545
    %676 = vmatpush1.bf16.msra.mxu0 %v544
    %677 = vmatprep.subr.bf16.mxu0 %v543
    %678 = vmatpush1.bf16.msra.mxu0 %v542
    %679 = vmatprep.subr.bf16.mxu0 %v541
    %680 = vmatpush1.bf16.msra.mxu0 %v540
    %681 = vmatprep.subr.bf16.mxu0 %v539
    %682 = vmatpush1.bf16.msra.mxu0 %v538
    %683 = vmatprep.subr.bf16.mxu0 %v537
    %684 = vmatpush1.bf16.msra.mxu0 %v536
    %685 = vmatprep.subr.bf16.mxu0 %v535
    %686 = vmatpush1.bf16.msra.mxu0 %v534
    %687 = vmatprep.subr.bf16.mxu0 %v565
    %688 = vmatpush2.bf16.msra.mxu0 %v564
    %689 = vmatprep.subr.bf16.mxu0 %v563
    %690 = vmatpush2.bf16.msra.mxu0 %v562
    %691 = vmatprep.subr.bf16.mxu0 %v561
    %692 = vmatpush2.bf16.msra.mxu0 %v560
    %693 = vmatprep.subr.bf16.mxu0 %v559
    %694 = vmatpush2.bf16.msra.mxu0 %v558
    %695 = vmatprep.subr.bf16.mxu0 %v557
    %696 = vmatpush2.bf16.msra.mxu0 %v556
    %697 = vmatprep.subr.bf16.mxu0 %v555
    %698 = vmatpush2.bf16.msra.mxu0 %v554
    %699 = vmatprep.subr.bf16.mxu0 %v553
    %700 = vmatpush2.bf16.msra.mxu0 %v552
    %701 = vmatprep.subr.bf16.mxu0 %v551
    %702 = vmatpush2.bf16.msra.mxu0 %v550
    %703 = vmatprep.mubr.bf16.mxu0 %v233
    %704 = vmatmul.mubr.bf16.gmra.mxu0 %v232
    %v705 = vpop.f32.mrf.mxu0
    %v706 = vadd.f32 %v665, %v705
    %v707 = vpop.f32.mrf.mxu0
    %v708 = vadd.f32 %v667, %v707
    %v709 = vpop.f32.mrf.mxu0
    %v710 = vpop.f32.mrf.mxu0
    %711 = vdwg.mxu0
    %v712 = vmax.f32 %v706, 0.0
    %v713 = vmax.f32 %v708, 0.0
    %v714 = vpack.c.bf16 %v712, %v712
    %v715 = vpack.c.bf16 %v713, %v713
    %v716 = vld [vmem:[#allocation5] sm:$0xff]
    %v717 = vld [vmem:[#allocation5 + $0x8] sm:$0xff]
    %v718 = vld [vmem:[#allocation5 + $0x10] sm:$0xff]
    %v719 = vld [vmem:[#allocation5 + $0x18] sm:$0xff]
    %v720 = vld [vmem:[#allocation5 + $0x20] sm:$0xff]
    %v721 = vld [vmem:[#allocation5 + $0x28] sm:$0xff]
    %v722 = vld [vmem:[#allocation5 + $0x30] sm:$0xff]
    %v723 = vld [vmem:[#allocation5 + $0x38] sm:$0xff]
    %v724 = vld [vmem:[#allocation5 + $0x40] sm:$0xff]
    %v725 = vld [vmem:[#allocation5 + $0x48] sm:$0xff]
    %v726 = vld [vmem:[#allocation5 + $0x50] sm:$0xff]
    %v727 = vld [vmem:[#allocation5 + $0x58] sm:$0xff]
    %v728 = vld [vmem:[#allocation5 + $0x60] sm:$0xff]
    %v729 = vld [vmem:[#allocation5 + $0x68] sm:$0xff]
    %v730 = vld [vmem:[#allocation5 + $0x70] sm:$0xff]
    %v731 = vld [vmem:[#allocation5 + $0x78] sm:$0xff]
    %v732 = vld [vmem:[#allocation5 + $0x80] sm:$0xff]
    %v733 = vld [vmem:[#allocation5 + $0x88] sm:$0xff]
    %v734 = vld [vmem:[#allocation5 + $0x90] sm:$0xff]
    %v735 = vld [vmem:[#allocation5 + $0x98] sm:$0xff]
    %v736 = vld [vmem:[#allocation5 + $0xa0] sm:$0xff]
    %v737 = vld [vmem:[#allocation5 + $0xa8] sm:$0xff]
    %v738 = vld [vmem:[#allocation5 + $0xb0] sm:$0xff]
    %v739 = vld [vmem:[#allocation5 + $0xb8] sm:$0xff]
    %v740 = vld [vmem:[#allocation5 + $0xc0] sm:$0xff]
    %v741 = vld [vmem:[#allocation5 + $0xc8] sm:$0xff]
    %v742 = vld [vmem:[#allocation5 + $0xd0] sm:$0xff]
    %v743 = vld [vmem:[#allocation5 + $0xd8] sm:$0xff]
    %v744 = vld [vmem:[#allocation5 + $0xe0] sm:$0xff]
    %v745 = vld [vmem:[#allocation5 + $0xe8] sm:$0xff]
    %v746 = vld [vmem:[#allocation5 + $0xf0] sm:$0xff]
    %v747 = vld [vmem:[#allocation5 + $0xf8] sm:$0xff]
    %v748 = vld [vmem:[%s6] sm:$0x3]
    %v750 = vlaneseq
    %v751 = vshrl.u32 %v750, 7
    %v752 = vsub.s32 0, %v751
    %v753 = vrot.slane %v748, %v752
    %v754 = vlaneseq
    %v755 = vshrl.u32 %v754, 7
    %v756 = vsub.s32 1, %v755
    %v757 = vrot.slane %v748, %v756
    %v792 = vunpack.c.l.b16 %v716
    %v793 = vunpack.c.h.b16 %v716
    %v794 = vunpack.c.l.b16 %v717
    %v795 = vunpack.c.h.b16 %v717
    %v796 = vunpack.c.l.b16 %v718
    %v797 = vunpack.c.h.b16 %v718
    %v798 = vunpack.c.l.b16 %v719
    %v799 = vunpack.c.h.b16 %v719
    %v800 = vunpack.c.l.b16 %v720
    %v801 = vunpack.c.h.b16 %v720
    %v802 = vunpack.c.l.b16 %v721
    %v803 = vunpack.c.h.b16 %v721
    %v804 = vunpack.c.l.b16 %v722
    %v805 = vunpack.c.h.b16 %v722
    %v806 = vunpack.c.l.b16 %v723
    %v807 = vunpack.c.h.b16 %v723
    %v808 = vunpack.c.l.b16 %v724
    %v809 = vunpack.c.h.b16 %v724
    %v810 = vunpack.c.l.b16 %v725
    %v811 = vunpack.c.h.b16 %v725
    %v812 = vunpack.c.l.b16 %v726
    %v813 = vunpack.c.h.b16 %v726
    %v814 = vunpack.c.l.b16 %v727
    %v815 = vunpack.c.h.b16 %v727
    %v816 = vunpack.c.l.b16 %v728
    %v817 = vunpack.c.h.b16 %v728
    %v818 = vunpack.c.l.b16 %v729
    %v819 = vunpack.c.h.b16 %v729
    %v820 = vunpack.c.l.b16 %v730
    %v821 = vunpack.c.h.b16 %v730
    %v822 = vunpack.c.l.b16 %v731
    %v823 = vunpack.c.h.b16 %v731
    %v824 = vunpack.c.l.b16 %v732
    %v825 = vunpack.c.h.b16 %v732
    %v826 = vunpack.c.l.b16 %v733
    %v827 = vunpack.c.h.b16 %v733
    %v828 = vunpack.c.l.b16 %v734
    %v829 = vunpack.c.h.b16 %v734
    %v830 = vunpack.c.l.b16 %v735
    %v831 = vunpack.c.h.b16 %v735
    %v832 = vunpack.c.l.b16 %v736
    %v833 = vunpack.c.h.b16 %v736
    %v834 = vunpack.c.l.b16 %v737
    %v835 = vunpack.c.h.b16 %v737
    %v836 = vunpack.c.l.b16 %v738
    %v837 = vunpack.c.h.b16 %v738
    %v838 = vunpack.c.l.b16 %v739
    %v839 = vunpack.c.h.b16 %v739
    %v840 = vunpack.c.l.b16 %v740
    %v841 = vunpack.c.h.b16 %v740
    %v842 = vunpack.c.l.b16 %v741
    %v843 = vunpack.c.h.b16 %v741
    %v844 = vunpack.c.l.b16 %v742
    %v845 = vunpack.c.h.b16 %v742
    %v846 = vunpack.c.l.b16 %v743
    %v847 = vunpack.c.h.b16 %v743
    %v848 = vunpack.c.l.b16 %v744
    %v849 = vunpack.c.h.b16 %v744
    %v850 = vunpack.c.l.b16 %v745
    %v851 = vunpack.c.h.b16 %v745
    %v852 = vunpack.c.l.b16 %v746
    %v853 = vunpack.c.h.b16 %v746
    %v854 = vunpack.c.l.b16 %v747
    %v855 = vunpack.c.h.b16 %v747
    %v856 = vpack.c.b16 %v794, %v792
    %v857 = vpack.c.b16 %v795, %v793
    %v858 = vpack.c.b16 %v798, %v796
    %v859 = vpack.c.b16 %v799, %v797
    %v860 = vpack.c.b16 %v802, %v800
    %v861 = vpack.c.b16 %v803, %v801
    %v862 = vpack.c.b16 %v806, %v804
    %v863 = vpack.c.b16 %v807, %v805
    %v864 = vpack.c.b16 %v810, %v808
    %v865 = vpack.c.b16 %v811, %v809
    %v866 = vpack.c.b16 %v814, %v812
    %v867 = vpack.c.b16 %v815, %v813
    %v868 = vpack.c.b16 %v818, %v816
    %v869 = vpack.c.b16 %v819, %v817
    %v870 = vpack.c.b16 %v822, %v820
    %v871 = vpack.c.b16 %v823, %v821
    %v872 = vpack.c.b16 %v826, %v824
    %v873 = vpack.c.b16 %v827, %v825
    %v874 = vpack.c.b16 %v830, %v828
    %v875 = vpack.c.b16 %v831, %v829
    %v876 = vpack.c.b16 %v834, %v832
    %v877 = vpack.c.b16 %v835, %v833
    %v878 = vpack.c.b16 %v838, %v836
    %v879 = vpack.c.b16 %v839, %v837
    %v880 = vpack.c.b16 %v842, %v840
    %v881 = vpack.c.b16 %v843, %v841
    %v882 = vpack.c.b16 %v846, %v844
    %v883 = vpack.c.b16 %v847, %v845
    %v884 = vpack.c.b16 %v850, %v848
    %v885 = vpack.c.b16 %v851, %v849
    %v886 = vpack.c.b16 %v854, %v852
    %v887 = vpack.c.b16 %v855, %v853
    %920 = vmatprep.subr.bf16.mxu0 %v871
    %921 = vmatpush1.bf16.msra.mxu0 %v870
    %922 = vmatprep.subr.bf16.mxu0 %v869
    %923 = vmatpush1.bf16.msra.mxu0 %v868
    %924 = vmatprep.subr.bf16.mxu0 %v867
    %925 = vmatpush1.bf16.msra.mxu0 %v866
    %926 = vmatprep.subr.bf16.mxu0 %v865
    %927 = vmatpush1.bf16.msra.mxu0 %v864
    %928 = vmatprep.subr.bf16.mxu0 %v863
    %929 = vmatpush1.bf16.msra.mxu0 %v862
    %930 = vmatprep.subr.bf16.mxu0 %v861
    %931 = vmatpush1.bf16.msra.mxu0 %v860
    %932 = vmatprep.subr.bf16.mxu0 %v859
    %933 = vmatpush1.bf16.msra.mxu0 %v858
    %934 = vmatprep.subr.bf16.mxu0 %v857
    %935 = vmatpush1.bf16.msra.mxu0 %v856
    %936 = vmatprep.subr.bf16.mxu0 %v887
    %937 = vmatpush2.bf16.msra.mxu0 %v886
    %938 = vmatprep.subr.bf16.mxu0 %v885
    %939 = vmatpush2.bf16.msra.mxu0 %v884
    %940 = vmatprep.subr.bf16.mxu0 %v883
    %941 = vmatpush2.bf16.msra.mxu0 %v882
    %942 = vmatprep.subr.bf16.mxu0 %v881
    %943 = vmatpush2.bf16.msra.mxu0 %v880
    %944 = vmatprep.subr.bf16.mxu0 %v879
    %945 = vmatpush2.bf16.msra.mxu0 %v878
    %946 = vmatprep.subr.bf16.mxu0 %v877
    %947 = vmatpush2.bf16.msra.mxu0 %v876
    %948 = vmatprep.subr.bf16.mxu0 %v875
    %949 = vmatpush2.bf16.msra.mxu0 %v874
    %950 = vmatprep.subr.bf16.mxu0 %v873
    %951 = vmatpush2.bf16.msra.mxu0 %v872
    %952 = vmatprep.mubr.bf16.mxu0 %v715
    %953 = vmatmul.mubr.bf16.gmra.mxu0 %v714
    %v954 = vpop.f32.mrf.mxu0
    %v955 = vadd.f32 %v753, %v954
    %v956 = vpop.f32.mrf.mxu0
    %v957 = vadd.f32 %v757, %v956
    %v958 = vpop.f32.mrf.mxu0
    %v959 = vpop.f32.mrf.mxu0
    %960 = vdwg.mxu0
    %v961 = vmax.f32 %v955, 0.0
    %v962 = vmax.f32 %v957, 0.0
    %v963 = vpack.c.bf16 %v961, %v961
    %v964 = vpack.c.bf16 %v962, %v962
    %v965 = vld [vmem:[%s7] sm:$0xf]
    %v966 = vld [vmem:[%s7 + $0x4] sm:$0xf]
    %v967 = vld [vmem:[%s7 + $0x8] sm:$0xf]
    %v968 = vld [vmem:[%s7 + $0xc] sm:$0xf]
    %v969 = vld [vmem:[%s7 + $0x10] sm:$0xf]
    %v970 = vld [vmem:[%s7 + $0x14] sm:$0xf]
    %v971 = vld [vmem:[%s7 + $0x18] sm:$0xf]
    %v972 = vld [vmem:[%s7 + $0x1c] sm:$0xf]
    %v973 = vld [vmem:[%s7 + $0x20] sm:$0xf]
    %v974 = vld [vmem:[%s7 + $0x24] sm:$0xf]
    %v975 = vld [vmem:[%s7 + $0x28] sm:$0xf]
    %v976 = vld [vmem:[%s7 + $0x2c] sm:$0xf]
    %v977 = vld [vmem:[%s7 + $0x30] sm:$0xf]
    %v978 = vld [vmem:[%s7 + $0x34] sm:$0xf]
    %v979 = vld [vmem:[%s7 + $0x38] sm:$0xf]
    %v980 = vld [vmem:[%s7 + $0x3c] sm:$0xf]
    %v981 = vld [vmem:[%s7 + $0x40] sm:$0xf]
    %v982 = vld [vmem:[%s7 + $0x44] sm:$0xf]
    %v983 = vld [vmem:[%s7 + $0x48] sm:$0xf]
    %v984 = vld [vmem:[%s7 + $0x4c] sm:$0xf]
    %v985 = vld [vmem:[%s7 + $0x50] sm:$0xf]
    %v986 = vld [vmem:[%s7 + $0x54] sm:$0xf]
    %v987 = vld [vmem:[%s7 + $0x58] sm:$0xf]
    %v988 = vld [vmem:[%s7 + $0x5c] sm:$0xf]
    %v989 = vld [vmem:[%s7 + $0x60] sm:$0xf]
    %v990 = vld [vmem:[%s7 + $0x64] sm:$0xf]
    %v991 = vld [vmem:[%s7 + $0x68] sm:$0xf]
    %v992 = vld [vmem:[%s7 + $0x6c] sm:$0xf]
    %v993 = vld [vmem:[%s7 + $0x70] sm:$0xf]
    %v994 = vld [vmem:[%s7 + $0x74] sm:$0xf]
    %v995 = vld [vmem:[%s7 + $0x78] sm:$0xf]
    %v996 = vld [vmem:[%s7 + $0x7c] sm:$0xf]
    %v997 = vld [vmem:[%s8] sm:$0x1]
    %v999 = vlaneseq
    %v1000 = vshrl.u32 %v999, 7
    %v1001 = vsub.s32 0, %v1000
    %v1002 = vrot.slane %v997, %v1001
    %v1036 = vunpack.c.l.b16 %v965
    %v1037 = vunpack.c.l.b16 %v966
    %v1038 = vunpack.c.l.b16 %v967
    %v1039 = vunpack.c.l.b16 %v968
    %v1040 = vunpack.c.l.b16 %v969
    %v1041 = vunpack.c.l.b16 %v970
    %v1042 = vunpack.c.l.b16 %v971
    %v1043 = vunpack.c.l.b16 %v972
    %v1044 = vunpack.c.l.b16 %v973
    %v1045 = vunpack.c.l.b16 %v974
    %v1046 = vunpack.c.l.b16 %v975
    %v1047 = vunpack.c.l.b16 %v976
    %v1048 = vunpack.c.l.b16 %v977
    %v1049 = vunpack.c.l.b16 %v978
    %v1050 = vunpack.c.l.b16 %v979
    %v1051 = vunpack.c.l.b16 %v980
    %v1052 = vunpack.c.l.b16 %v981
    %v1053 = vunpack.c.l.b16 %v982
    %v1054 = vunpack.c.l.b16 %v983
    %v1055 = vunpack.c.l.b16 %v984
    %v1056 = vunpack.c.l.b16 %v985
    %v1057 = vunpack.c.l.b16 %v986
    %v1058 = vunpack.c.l.b16 %v987
    %v1059 = vunpack.c.l.b16 %v988
    %v1060 = vunpack.c.l.b16 %v989
    %v1061 = vunpack.c.l.b16 %v990
    %v1062 = vunpack.c.l.b16 %v991
    %v1063 = vunpack.c.l.b16 %v992
    %v1064 = vunpack.c.l.b16 %v993
    %v1065 = vunpack.c.l.b16 %v994
    %v1066 = vunpack.c.l.b16 %v995
    %v1067 = vunpack.c.l.b16 %v996
    %v1068 = vpack.c.b16 %v1037, %v1036
    %v1069 = vpack.c.b16 %v1039, %v1038
    %v1070 = vpack.c.b16 %v1041, %v1040
    %v1071 = vpack.c.b16 %v1043, %v1042
    %v1072 = vpack.c.b16 %v1045, %v1044
    %v1073 = vpack.c.b16 %v1047, %v1046
    %v1074 = vpack.c.b16 %v1049, %v1048
    %v1075 = vpack.c.b16 %v1051, %v1050
    %v1076 = vpack.c.b16 %v1053, %v1052
    %v1077 = vpack.c.b16 %v1055, %v1054
    %v1078 = vpack.c.b16 %v1057, %v1056
    %v1079 = vpack.c.b16 %v1059, %v1058
    %v1080 = vpack.c.b16 %v1061, %v1060
    %v1081 = vpack.c.b16 %v1063, %v1062
    %v1082 = vpack.c.b16 %v1065, %v1064
    %v1083 = vpack.c.b16 %v1067, %v1066
    %1100 = vmatprep.subr.bf16.mxu0 0
    %1101 = vmatpush1.bf16.msra.mxu0 %v1075
    %1102 = vmatprep.subr.bf16.mxu0 0
    %1103 = vmatpush1.bf16.msra.mxu0 %v1074
    %1104 = vmatprep.subr.bf16.mxu0 0
    %1105 = vmatpush1.bf16.msra.mxu0 %v1073
    %1106 = vmatprep.subr.bf16.mxu0 0
    %1107 = vmatpush1.bf16.msra.mxu0 %v1072
    %1108 = vmatprep.subr.bf16.mxu0 0
    %1109 = vmatpush1.bf16.msra.mxu0 %v1071
    %1110 = vmatprep.subr.bf16.mxu0 0
    %1111 = vmatpush1.bf16.msra.mxu0 %v1070
    %1112 = vmatprep.subr.bf16.mxu0 0
    %1113 = vmatpush1.bf16.msra.mxu0 %v1069
    %1114 = vmatprep.subr.bf16.mxu0 0
    %1115 = vmatpush1.bf16.msra.mxu0 %v1068
    %1116 = vmatprep.subr.bf16.mxu0 0
    %1117 = vmatpush2.bf16.msra.mxu0 %v1083
    %1118 = vmatprep.subr.bf16.mxu0 0
    %1119 = vmatpush2.bf16.msra.mxu0 %v1082
    %1120 = vmatprep.subr.bf16.mxu0 0
    %1121 = vmatpush2.bf16.msra.mxu0 %v1081
    %1122 = vmatprep.subr.bf16.mxu0 0
    %1123 = vmatpush2.bf16.msra.mxu0 %v1080
    %1124 = vmatprep.subr.bf16.mxu0 0
    %1125 = vmatpush2.bf16.msra.mxu0 %v1079
    %1126 = vmatprep.subr.bf16.mxu0 0
    %1127 = vmatpush2.bf16.msra.mxu0 %v1078
    %1128 = vmatprep.subr.bf16.mxu0 0
    %1129 = vmatpush2.bf16.msra.mxu0 %v1077
    %1130 = vmatprep.subr.bf16.mxu0 0
    %1131 = vmatpush2.bf16.msra.mxu0 %v1076
    %1132 = vmatprep.mubr.bf16.mxu0 %v964
    %1133 = vmatmul.mubr.bf16.gmra.mxu0 %v963
    %v1134 = vpop.f32.mrf.mxu0
    %v1135 = vadd.f32 %v1002, %v1134
    %v1136 = vpop.f32.mrf.mxu0
    %v1137 = vpop.f32.mrf.mxu0
    %v1138 = vpop.f32.mrf.mxu0
    %1139 = vdwg.mxu0
    %v1140 = vtanh.pop %v1135
    %v1141 = vld [vmem:[%s9] sm:$0x1]
    %v1143 = vlaneseq
    %v1144 = vshrl.u32 %v1143, 7
    %v1145 = vsub.s32 0, %v1144
    %v1146 = vrot.slane %v1141, %v1145
    %v1148 = vmul.f32 %v1140, %v1146
    %v1149 = vld [vmem:[%s10] sm:$0x1]
    %v1151 = vlaneseq
    %v1152 = vshrl.u32 %v1151, 7
    %v1153 = vsub.s32 0, %v1152
    %v1154 = vrot.slane %v1149, %v1153
    %v1156 = vadd.f32 %v1148, %v1154
    %vm1157 = vcmask 64512
    %1158 = vst.msk [vmem:[#allocation7] sm:$0xff] %vm1157, %v1156
    // Predicated region
    $region54: #{tpu_custom_call.1} parent=1 // pred_check
      _
    $region55: #{tpu_custom_call.1} parent=1 // pred_check_branch
      %1160 = sbr.rel (0) target = $region57
    $region56: #{tpu_custom_call.1} parent=1 // pred_region
      %s1162 = ssub.s32 128, 128
      %1163 = vsyncadd [#allocation4], %s1162
      %s1165 = sshll.u32 [#allocation7], 4
      %s1166 = int_to_ptr.vmem [resolvable:$true] %s1165
      %1168 = dma.vmem_to_hbm [thread:$0]  %s1166, 128, %s11, [#allocation4]
    $region57: #{tpu_custom_call.1} parent=1 // pred_fallthru
      _
    // Predicated region
    $region58: #{tpu_custom_call.1} parent=1 // pred_check
      _
    $region59: #{tpu_custom_call.1} parent=1 // pred_check_branch
      %1170 = sbr.rel (0) target = $region61
    $region60: #{tpu_custom_call.1} parent=1 // pred_region
      %1171 = dma.done [#allocation4], 128
    $region61: #{tpu_custom_call.1} parent=1 // pred_fallthru
      _
    %1172 = vsyncpa [#allocation3], 1
    %1173 = vsyncpa [#allocation6], 1
    %1174 = vsyncpa [#allocation4], 1

</llo_original>
